<compile_context>
chip_gen: v7x
topology: tpu7x:2x2x1
jax: 0.10.0
libtpu: 0.0.40
codegen_flags: <defaults>
</compile_context>

<pallas_src>
import functools

import jax
import jax.numpy as jnp
from jax import lax
from jax.experimental import pallas as pl
from jax.experimental.pallas import tpu as pltpu


def _round_up(x, m):
    return (x + m - 1) // m * m


def _cdiv(a, b):
    return (a + b - 1) // b


def _vmem_capacity_bytes():
    try:
        return int(pltpu.get_tpu_info().vmem_capacity_bytes)
    except Exception:
        # Conservative fallback (assume a 64 MiB / multi-TC part).
        return 64 * 1024 * 1024


def _pick_tile_k(K, cap):
    """Largest 128-multiple <= cap that divides K (avoids K zero-padding)."""
    if K <= cap:
        return K
    for cand in range(cap, 127, -128):
        if K % cand == 0:
            return cand
    return cap  # no clean divisor; caller pads K


# ---------------------------------------------------------------------------
# Kernels
# ---------------------------------------------------------------------------
def mlp_block_kernel_single_k(x_ref, w_ref, b_ref, o_ref):
    # Whole K fits in one tile: no accumulator scratch needed.
    y = lax.dot_general(
        x_ref[...], w_ref[...],
        dimension_numbers=(((1,), (1,)), ((), ())),   # x @ W.T, MXU-native
        preferred_element_type=jnp.float32,
    )
    y = y + b_ref[...]                                # f32 epilogue on the VPU
    o_ref[...] = jnp.maximum(y, 0.0).astype(o_ref.dtype)


def mlp_block_kernel_multi_k(x_ref, w_ref, b_ref, o_ref, acc_ref):
    k = pl.program_id(2)

    @pl.when(k == 0)
    def _():
        acc_ref[...] = jnp.zeros_like(acc_ref)

    acc_ref[...] += lax.dot_general(
        x_ref[...], w_ref[...],
        dimension_numbers=(((1,), (1,)), ((), ())),   # x @ W.T, MXU-native
        preferred_element_type=jnp.float32,
    )

    @pl.when(k == pl.num_programs(2) - 1)
    def _():
        y = acc_ref[...] + b_ref[...]
        o_ref[...] = jnp.maximum(y, 0.0).astype(o_ref.dtype)


# ---------------------------------------------------------------------------
# Wrapper
# ---------------------------------------------------------------------------
def mlp_block(x, weight, bias, *, compute_dtype=None,
              tile_m=None, tile_n=None, tile_k=None):
    """x: [..., in_features]; weight: [out_features, in_features]; bias: [out_features]."""
    orig_shape = x.shape
    x = x.reshape(-1, orig_shape[-1])
    M, K = x.shape
    N, K2 = weight.shape
    assert K == K2 and bias.shape == (N,)
    out_dtype = x.dtype

    # bf16 MXU by default (f32 accumulate); pass jnp.float32 for the exact path.
    if compute_dtype is None:
        compute_dtype = jnp.bfloat16 if x.dtype == jnp.float32 else x.dtype

    # Wrapper-side cast so the kernel DMAs compute_dtype tiles from HBM.
    if x.dtype != compute_dtype:
        x = x.astype(compute_dtype)
    if weight.dtype != compute_dtype:
        weight = weight.astype(compute_dtype)

    csize = jnp.dtype(compute_dtype).itemsize
    osize = jnp.dtype(out_dtype).itemsize

    # ---- generation-aware VMEM budget & tile caps -----------------------------
    vmem_cap = _vmem_capacity_bytes()
    small_vmem = vmem_cap < 96 * 1024 * 1024        # v7x-like: 64 MiB/TC, 2 TCs
    if small_vmem:
        vmem_limit = 44 * 1024 * 1024
        tm_cap = 512
        tn_cap = 1024 if csize <= 2 else 512
        tk_cap = 4096 if csize <= 2 else 1024
    else:                                            # v5e/v6e: 128 MiB VMEM
        vmem_limit = 100 * 1024 * 1024
        tm_cap = 512
        tn_cap = 1024
        tk_cap = 4096 if csize <= 2 else 2048

    # ---- lane-dense output: pad N up to a multiple of 128 (no-op if aligned) --
    n_pad = _round_up(N, 128)

    # ---- tile sizes ------------------------------------------------------------
    auto_mn = (tile_m is None) and (tile_n is None)
    if tile_m is None:
        tile_m = M if M <= tm_cap else tm_cap
    if tile_n is None:
        tile_n = n_pad if n_pad <= tn_cap else tn_cap
    if tile_k is None:
        tile_k = _pick_tile_k(K, tk_cap)

    # v7x has 2 TensorCores: a single (i, j) block leaves one idle -> split.
    if small_vmem and auto_mn and tile_m >= M and tile_n >= n_pad:
        if n_pad >= 256:
            tile_n = _round_up(_cdiv(n_pad, 2), 128)
        elif M >= 16:
            tile_m = _round_up(_cdiv(M, 2), 8)

    # ---- padding (single jnp.pad per array; K-pad usually avoided) ------------
    k_pad = _round_up(K, tile_k)
    pad_n, pad_k = n_pad - N, k_pad - K
    if pad_n or pad_k:
        weight = jnp.pad(weight, ((0, pad_n), (0, pad_k)))
    if pad_k:
        x = jnp.pad(x, ((0, 0), (0, pad_k)))
    if pad_n:
        bias = jnp.pad(bias, (0, pad_n))
    b2 = bias.astype(jnp.float32).reshape(1, n_pad)   # epilogue always f32

    gi = _cdiv(M, tile_m)
    gj = _cdiv(n_pad, tile_n)
    gk = k_pad // tile_k

    # Actual HBM traffic: weight re-streamed per i block, x re-streamed per j block.
    cost = pl.CostEstimate(
        flops=2 * M * K * N,
        transcendentals=0,
        bytes_accessed=(weight.size * csize * gi
                        + x.size * csize * gj
                        + b2.size * 4
                        + M * n_pad * osize),
    )

    if gk == 1:
        kernel = mlp_block_kernel_single_k
        grid = (gi, gj)
        in_specs = [
            pl.BlockSpec((tile_m, tile_k), lambda i, j: (i, 0)),   # x tile
            pl.BlockSpec((tile_n, tile_k), lambda i, j: (j, 0)),   # W tile ([N, K])
            pl.BlockSpec((1, tile_n),      lambda i, j: (0, j)),   # bias row tile
        ]
        out_specs = pl.BlockSpec((tile_m, tile_n), lambda i, j: (i, j))
        scratch_shapes = []
        dim_sem = ("parallel", "parallel")
    else:
        kernel = mlp_block_kernel_multi_k
        grid = (gi, gj, gk)
        in_specs = [
            pl.BlockSpec((tile_m, tile_k), lambda i, j, k: (i, k)),
            pl.BlockSpec((tile_n, tile_k), lambda i, j, k: (j, k)),
            pl.BlockSpec((1, tile_n),      lambda i, j, k: (0, j)),
        ]
        out_specs = pl.BlockSpec((tile_m, tile_n), lambda i, j, k: (i, j))
        scratch_shapes = [pltpu.VMEM((tile_m, tile_n), jnp.float32)]
        dim_sem = ("parallel", "parallel", "arbitrary")

    out = pl.pallas_call(
        kernel,
        out_shape=jax.ShapeDtypeStruct((M, n_pad), out_dtype),
        grid_spec=pltpu.PrefetchScalarGridSpec(
            num_scalar_prefetch=0,
            grid=grid,
            in_specs=in_specs,
            out_specs=out_specs,
            scratch_shapes=scratch_shapes,
        ),
        compiler_params=pltpu.CompilerParams(
            dimension_semantics=dim_sem,
            vmem_limit_bytes=vmem_limit,
        ),
        cost_estimate=cost,
    )(x, weight, b2)

    if n_pad != N:
        out = out[:, :N]
    return out.reshape(*orig_shape[:-1], N)


def mlp_block_ref(x, weight, bias):
    # pure-JAX reference of the eval-mode forward (high-precision matmul)
    y = jnp.dot(x, weight.T, precision=lax.Precision.HIGHEST) + bias
    return jnp.maximum(y, 0.0)


if __name__ == "__main__":
    key = jax.random.PRNGKey(0)
    k_x, k_w, k_b = jax.random.split(key, 3)

    # ---- test 1: small shapes implied by the module (single-K-step kernel) ----
    M, in_features, out_features = 8, 32, 32
    x = jax.random.normal(k_x, (M, in_features), dtype=jnp.float32)
    bound = 1.0 / jnp.sqrt(jnp.float32(in_features))
    weight = jax.random.uniform(k_w, (out_features, in_features),
                                minval=-bound, maxval=bound, dtype=jnp.float32)
    bias = jax.random.uniform(k_b, (out_features,),
                              minval=-bound, maxval=bound, dtype=jnp.float32)
    ref = mlp_block_ref(x, weight, bias)

    # exact (f32 MXU) opt-out path
    out_f32 = jax.block_until_ready(
        mlp_block(x, weight, bias, compute_dtype=jnp.float32))
    assert out_f32.shape == (M, out_features)
    assert jnp.allclose(out_f32, ref, atol=1e-5, rtol=1e-5), "f32 path mismatch"

    # default path: bf16 MXU inputs, f32 accumulation
    out_bf16 = jax.block_until_ready(mlp_block(x, weight, bias))
    assert jnp.allclose(out_bf16, ref, atol=5e-2, rtol=5e-2), "bf16 path mismatch"

    # ---- test 2: forces the multi-K (accumulator) kernel -----------------------
    M2, K2d, N2 = 16, 256, 128
    k_x2, k_w2, k_b2 = jax.random.split(jax.random.PRNGKey(1), 3)
    x2 = jax.random.normal(k_x2, (M2, K2d), dtype=jnp.float32)
    bound2 = 1.0 / jnp.sqrt(jnp.float32(K2d))
    w2 = jax.random.uniform(k_w2, (N2, K2d), minval=-bound2, maxval=bound2,
                            dtype=jnp.float32)
    b2 = jax.random.uniform(k_b2, (N2,), minval=-bound2, maxval=bound2,
                            dtype=jnp.float32)
    ref2 = mlp_block_ref(x2, w2, b2)
    out2 = jax.block_until_ready(
        mlp_block(x2, w2, b2, compute_dtype=jnp.float32, tile_k=128))
    assert out2.shape == (M2, N2)
    assert jnp.allclose(out2, ref2, atol=5e-3, rtol=5e-3), "multi-K path mismatch"

    print("KERNEL_OK")
</pallas_src>

<mosaic_0001>
module attributes {stable_mosaic.version = 11 : i64} {
  func.func @mlp_block_kernel_single_k(%arg0: i32, %arg1: i32, %arg2: memref<8x32xf32, #tpu.memory_space<vmem>>, %arg3: memref<128x32xf32, #tpu.memory_space<vmem>>, %arg4: memref<1x128xf32, #tpu.memory_space<vmem>>, %arg5: memref<8x128xf32, #tpu.memory_space<vmem>>) attributes {dimension_semantics = [#tpu.dimension_semantics<parallel>, #tpu.dimension_semantics<parallel>], iteration_bounds = array<i64: 1, 1>, scalar_prefetch = 0 : i64, scratch_operands = 0 : i64, tpu.core_type = #tpu.core_type<tc>, window_params = [{transform_indices = @transform_0, window_bounds = array<i64: 8, 32>}, {transform_indices = @transform_1, window_bounds = array<i64: 128, 32>}, {transform_indices = @transform_2, window_bounds = array<i64: 1, 128>}, {transform_indices = @transform_3, window_bounds = array<i64: 8, 128>}]} {
    %c0 = arith.constant 0 : index
    %c0_0 = arith.constant 0 : index
    %0 = vector.load %arg2[%c0, %c0_0] : memref<8x32xf32, #tpu.memory_space<vmem>>, vector<8x32xf32>
    %c0_1 = arith.constant 0 : index
    %c0_2 = arith.constant 0 : index
    %1 = vector.load %arg3[%c0_1, %c0_2] : memref<128x32xf32, #tpu.memory_space<vmem>>, vector<128x32xf32>
    %cst = arith.constant dense<0.000000e+00> : vector<8x128xf32>
    %2 = tpu.matmul %0, %1, %cst {dimension_numbers = #tpu.dot_dimension_numbers<[1], [1], [0], [0], [0, 0, 1, 0], [], []>} : vector<8x32xf32>, vector<128x32xf32>, vector<8x128xf32> -> vector<8x128xf32>
    %c0_3 = arith.constant 0 : index
    %c0_4 = arith.constant 0 : index
    %3 = vector.load %arg4[%c0_3, %c0_4] : memref<1x128xf32, #tpu.memory_space<vmem>>, vector<1x128xf32>
    %4 = vector.broadcast %3 : vector<1x128xf32> to vector<8x128xf32>
    %5 = arith.addf %2, %4 : vector<8x128xf32>
    %cst_5 = arith.constant 0.000000e+00 : f32
    %6 = vector.broadcast %cst_5 : f32 to vector<8x128xf32>
    %7 = arith.maximumf %5, %6 : vector<8x128xf32>
    %c0_6 = arith.constant 0 : index
    %c0_7 = arith.constant 0 : index
    %8 = vector.load %arg5[%c0_6, %c0_7] : memref<8x128xf32, #tpu.memory_space<vmem>>, vector<8x128xf32>
    tpu.vector_store %arg5[%c0_6, %c0_7], %7 {strides = array<i32>} : memref<8x128xf32, #tpu.memory_space<vmem>>, vector<8x128xf32>,
    return
  }
  func.func @transform_0(%arg0: i32, %arg1: i32) -> (i32, i32) {
    %c0_i32 = arith.constant 0 : i32
    %c0_i32_0 = arith.constant 0 : i32
    return %arg0, %c0_i32 : i32, i32
  }
  func.func @transform_1(%arg0: i32, %arg1: i32) -> (i32, i32) {
    %c0_i32 = arith.constant 0 : i32
    %c0_i32_0 = arith.constant 0 : i32
    return %arg1, %c0_i32 : i32, i32
  }
  func.func @transform_2(%arg0: i32, %arg1: i32) -> (i32, i32) {
    %c0_i32 = arith.constant 0 : i32
    %c0_i32_0 = arith.constant 0 : i32
    return %c0_i32, %arg1 : i32, i32
  }
  func.func @transform_3(%arg0: i32, %arg1: i32) -> (i32, i32) {
    %c0_i32 = arith.constant 0 : i32
    return %arg0, %arg1 : i32, i32
  }
}

</mosaic_0001>

<llo_original>
// kernel: tpu_custom_call.1
$region0: #{tpu_custom_call.1}
  #allocation0 [shape = 'u32[]', space=smem, size = 0x4, offset = 0x4, fixed_abs, tag = 'smem constant byte address 0x4 - core index']
  #allocation1 [shape = 'u32[144,128]{1,0:T(1,128)}', space=vmem, size = 0x12000, scoped, tag = 'internal scratch']
  %s0 = inlined_call_operand.vmem [shape: f32[8,32], index: 0, kind: input, shape index: {}]
  %s1 = inlined_call_operand.vmem [shape: f32[128,32], index: 1, kind: input, shape index: {}]
  %s2 = inlined_call_operand.vmem [shape: f32[1,128], index: 2, kind: input, shape index: {}]
  %s3 = inlined_call_operand.hbm [shape: f32[8,128], index: 3, kind: output, shape index: {}]
  %s4 = sld [smem:[#allocation0]]
  $region22: #{tpu_custom_call.1} parent=0
    _
  %s6 = ssub.s32 1, %s4
  %s7 = scalar_select 0, %s6, %s4
  $region1: #{tpu_custom_call.1} parent=0
    #allocation2 [shape = 'u8[4096]{0}', space=vmem, size = 0x1000, scoped, tag = 'output window, operand 0, single buffered']
    #allocation3 [shape = 's32[1]{0}', space=sflag, size = 0x4, scoped, tag = 'scoped memory for tpu_custom_call.1']
    %8 = vsyncpa [#allocation3], 0
    // Predicated region
    $region2: #{tpu_custom_call.1} parent=1 // pred_check
      _
    $region3: #{tpu_custom_call.1} parent=1 // pred_check_branch
      %10 = sbr.rel (0) target = $region5
    $region4: #{tpu_custom_call.1} parent=1 // pred_region
      _
    $region5: #{tpu_custom_call.1} parent=1 // pred_fallthru
      _
    // Predicated region
    $region6: #{tpu_custom_call.1} parent=1 // pred_check
      _
    $region7: #{tpu_custom_call.1} parent=1 // pred_check_branch
      %12 = sbr.rel (0) target = $region9
    $region8: #{tpu_custom_call.1} parent=1 // pred_region
      _
    $region9: #{tpu_custom_call.1} parent=1 // pred_fallthru
      _
    // Predicated region
    $region10: #{tpu_custom_call.1} parent=1 // pred_check
      _
    $region11: #{tpu_custom_call.1} parent=1 // pred_check_branch
      %14 = sbr.rel (0) target = $region13
    $region12: #{tpu_custom_call.1} parent=1 // pred_region
      _
    $region13: #{tpu_custom_call.1} parent=1 // pred_fallthru
      _
    %v15 = vld [vmem:[%s0] sm:$0xff]
    %v16 = vld [vmem:[%s1] sm:$0xff]
    %v17 = vld [vmem:[%s1 + $0x8] sm:$0xff]
    %v18 = vld [vmem:[%s1 + $0x10] sm:$0xff]
    %v19 = vld [vmem:[%s1 + $0x18] sm:$0xff]
    %v20 = vld [vmem:[%s1 + $0x20] sm:$0xff]
    %v21 = vld [vmem:[%s1 + $0x28] sm:$0xff]
    %v22 = vld [vmem:[%s1 + $0x30] sm:$0xff]
    %v23 = vld [vmem:[%s1 + $0x38] sm:$0xff]
    %v24 = vld [vmem:[%s1 + $0x40] sm:$0xff]
    %v25 = vld [vmem:[%s1 + $0x48] sm:$0xff]
    %v26 = vld [vmem:[%s1 + $0x50] sm:$0xff]
    %v27 = vld [vmem:[%s1 + $0x58] sm:$0xff]
    %v28 = vld [vmem:[%s1 + $0x60] sm:$0xff]
    %v29 = vld [vmem:[%s1 + $0x68] sm:$0xff]
    %v30 = vld [vmem:[%s1 + $0x70] sm:$0xff]
    %v31 = vld [vmem:[%s1 + $0x78] sm:$0xff]
    %v32 = vld [vmem:[%s2] sm:$0x1]
    %v34 = vlaneseq
    %v35 = vshrl.u32 %v34, 7
    %v36 = vsub.s32 0, %v35
    %v37 = vrot.slane %v32, %v36
    %vm39 = vcmask 261120
    %v41 = vsel %vm39, %v15, 0
    %v44 = vsel %vm39, %v16, 0
    %v47 = vsel %vm39, %v17, 0
    %v50 = vsel %vm39, %v18, 0
    %v53 = vsel %vm39, %v19, 0
    %v56 = vsel %vm39, %v20, 0
    %v59 = vsel %vm39, %v21, 0
    %v62 = vsel %vm39, %v22, 0
    %v65 = vsel %vm39, %v23, 0
    %v68 = vsel %vm39, %v24, 0
    %v71 = vsel %vm39, %v25, 0
    %v74 = vsel %vm39, %v26, 0
    %v77 = vsel %vm39, %v27, 0
    %v80 = vsel %vm39, %v28, 0
    %v83 = vsel %vm39, %v29, 0
    %v86 = vsel %vm39, %v30, 0
    %v89 = vsel %vm39, %v31, 0
    %91 = vmatprep.subr.mxu0 0.0
    %92 = vmatpush1.xpose.msra.mxu0 %v44
    %93 = vmatprep.subr.mxu0 0.0
    %94 = vmatpush1.xpose.msra.mxu0 %v47
    %95 = vmatprep.subr.mxu0 0.0
    %96 = vmatpush1.xpose.msra.mxu0 %v50
    %97 = vmatprep.subr.mxu0 0.0
    %98 = vmatpush1.xpose.msra.mxu0 %v53
    %99 = vmatprep.subr.mxu0 0.0
    %100 = vmatpush1.xpose.msra.mxu0 %v56
    %101 = vmatprep.subr.mxu0 0.0
    %102 = vmatpush1.xpose.msra.mxu0 %v59
    %103 = vmatprep.subr.mxu0 0.0
    %104 = vmatpush1.xpose.msra.mxu0 %v62
    %105 = vmatprep.subr.mxu0 0.0
    %106 = vmatpush1.xpose.msra.mxu0 %v65
    %107 = vmatprep.subr.mxu0 0.0
    %108 = vmatpush1.xpose.msra.mxu0 %v68
    %109 = vmatprep.subr.mxu0 0.0
    %110 = vmatpush1.xpose.msra.mxu0 %v71
    %111 = vmatprep.subr.mxu0 0.0
    %112 = vmatpush1.xpose.msra.mxu0 %v74
    %113 = vmatprep.subr.mxu0 0.0
    %114 = vmatpush1.xpose.msra.mxu0 %v77
    %115 = vmatprep.subr.mxu0 0.0
    %116 = vmatpush1.xpose.msra.mxu0 %v80
    %117 = vmatprep.subr.mxu0 0.0
    %118 = vmatpush1.xpose.msra.mxu0 %v83
    %119 = vmatprep.subr.mxu0 0.0
    %120 = vmatpush1.xpose.msra.mxu0 %v86
    %121 = vmatprep.subr.mxu0 0.0
    %122 = vmatpush1.xpose.msra.mxu0 %v89
    %123 = vmatprep.subr.mxu0 0.0
    %124 = vmatpush1.xpose.msra.mxu0 0.0
    %125 = vmatprep.subr.mxu0 0.0
    %126 = vmatpush1.xpose.msra.mxu0 0.0
    %127 = vmatprep.subr.mxu0 0.0
    %128 = vmatpush1.xpose.msra.mxu0 0.0
    %129 = vmatprep.subr.mxu0 0.0
    %130 = vmatpush1.xpose.msra.mxu0 0.0
    %131 = vmatprep.subr.mxu0 0.0
    %132 = vmatpush1.xpose.msra.mxu0 0.0
    %133 = vmatprep.subr.mxu0 0.0
    %134 = vmatpush1.xpose.msra.mxu0 0.0
    %135 = vmatprep.subr.mxu0 0.0
    %136 = vmatpush1.xpose.msra.mxu0 0.0
    %137 = vmatprep.subr.mxu0 0.0
    %138 = vmatpush1.xpose.msra.mxu0 0.0
    %139 = vmatprep.subr.mxu0 0.0
    %140 = vmatpush1.xpose.msra.mxu0 0.0
    %141 = vmatprep.subr.mxu0 0.0
    %142 = vmatpush1.xpose.msra.mxu0 0.0
    %143 = vmatprep.subr.mxu0 0.0
    %144 = vmatpush1.xpose.msra.mxu0 0.0
    %145 = vmatprep.subr.mxu0 0.0
    %146 = vmatpush1.xpose.msra.mxu0 0.0
    %147 = vmatprep.subr.mxu0 0.0
    %148 = vmatpush1.xpose.msra.mxu0 0.0
    %149 = vmatprep.subr.mxu0 0.0
    %150 = vmatpush1.xpose.msra.mxu0 0.0
    %151 = vmatprep.subr.mxu0 0.0
    %152 = vmatpush1.xpose.msra.mxu0 0.0
    %153 = vmatprep.subr.mxu0 0.0
    %154 = vmatpush1.xpose.msra.mxu0 0.0
    %155 = vmatprep.mubr.f32.mxu0 0.0
    %156 = vmatmul.mubr.f32.gmra.mrb[0].mxu0 %v41
    %v157 = vpop.f32.mrb[0].mxu0
    %v158 = vadd.f32 %v37, %v157
    %v159 = vpop.f32.mrb[0].mxu0
    %160 = vdwg.mxu0
    %v161 = vmax.f32 %v158, 0.0
    %162 = vst [vmem:[#allocation2] sm:$0xff] %v161
    // Predicated region
    $region14: #{tpu_custom_call.1} parent=1 // pred_check
      _
    $region15: #{tpu_custom_call.1} parent=1 // pred_check_branch
      %164 = sbr.rel (0) target = $region17
    $region16: #{tpu_custom_call.1} parent=1 // pred_region
      %s166 = ssub.s32 128, 128
      %167 = vsyncadd [#allocation3], %s166
      %s169 = sshll.u32 [#allocation2], 4
      %s170 = int_to_ptr.vmem [resolvable:$true] %s169
      %172 = dma.vmem_to_hbm [thread:$0]  %s170, 128, %s3, [#allocation3]
    $region17: #{tpu_custom_call.1} parent=1 // pred_fallthru
      _
    // Predicated region
    $region18: #{tpu_custom_call.1} parent=1 // pred_check
      _
    $region19: #{tpu_custom_call.1} parent=1 // pred_check_branch
      %174 = sbr.rel (0) target = $region21
    $region20: #{tpu_custom_call.1} parent=1 // pred_region
      %175 = dma.done [#allocation3], 128
    $region21: #{tpu_custom_call.1} parent=1 // pred_fallthru
      _
    %176 = vsyncpa [#allocation3], 1

</llo_original>
